<compile_context>
chip_gen: v6e
topology: v6e:2x2x1
jax: 0.10.0
libtpu: 0.0.40
codegen_flags: <defaults>
</compile_context>

<pallas_src>
import functools

import jax
import jax.numpy as jnp
from jax import lax
from jax.experimental import pallas as pl
from jax.experimental.pallas import tpu as pltpu


def _self_output_kernel(h_ref, x_ref, g_ref, b_ref, o_ref, *, eps, inv_h):
    # h_ref/x_ref: [tr, H]   g_ref/b_ref: [1, H]   o_ref: [tr, H]
    s = h_ref[...].astype(jnp.float32) + x_ref[...].astype(jnp.float32)

    # Single-pass moments (f32 accumulation; biased variance as in PyTorch LN).
    row_sum = jnp.sum(s, axis=-1, keepdims=True)
    row_sumsq = jnp.sum(s * s, axis=-1, keepdims=True)
    mu = row_sum * inv_h
    var = jnp.maximum(row_sumsq * inv_h - mu * mu, 0.0)
    inv = lax.rsqrt(var + eps)                              # EUP rsqrt

    y = (s - mu) * inv * g_ref[...].astype(jnp.float32) \
        + b_ref[...].astype(jnp.float32)
    o_ref[...] = y.astype(o_ref.dtype)


def _pick_row_tile(R, H, itemsize, block_rows, vmem_budget_bytes):
    """Largest row tile <= block_rows whose pipelined footprint fits the budget.

    Footprint: 2 inputs x 2 buffers + 1 output x 2 buffers = 6 tiles of [tr, H].
    """
    bytes_per_row = H * itemsize
    max_rows = max(8, vmem_budget_bytes // (6 * bytes_per_row))
    tr = min(block_rows, R, max_rows)
    if tr >= R:
        return R
    return max(8, (tr // 8) * 8)      # keep a sublane-aligned tile


def bert_self_output(hidden_states, input_tensor, gamma, beta,
                     *, eps=1e-12, block_rows=1024,
                     vmem_budget_bytes=32 << 20):
    """hidden_states, input_tensor: [S, B, H]; gamma, beta: [H]."""
    S, B, H = hidden_states.shape
    R = S * B

    # Fold (S, B) into one row axis: contiguous reshape, fills sublanes even
    # when B < 8, and gives a lane-dense [rows, H] output store.
    h2 = hidden_states.reshape(R, H)
    x2 = input_tensor.reshape(R, H)
    g2 = gamma.reshape(1, H)
    b2 = beta.reshape(1, H)

    itemsize = jnp.dtype(hidden_states.dtype).itemsize
    tr = _pick_row_tile(R, H, itemsize, block_rows, vmem_budget_bytes)
    grid = (pl.cdiv(R, tr),)

    # Explicit VMEM cap: double-buffered footprint + headroom, safe on every
    # generation (>= actual need, <= 48 MiB so it stays below v7x's 64 MiB
    # physical VMEM with room for compiler scratch).
    footprint = 6 * tr * H * itemsize + 4 * H * itemsize
    vmem_limit = int(min(footprint + (8 << 20), 48 << 20))

    kernel = functools.partial(_self_output_kernel, eps=eps, inv_h=1.0 / H)
    out2 = pl.pallas_call(
        kernel,
        out_shape=jax.ShapeDtypeStruct((R, H), hidden_states.dtype),
        grid=grid,
        in_specs=[
            pl.BlockSpec((tr, H), lambda i: (i, 0)),   # hidden_states tile
            pl.BlockSpec((tr, H), lambda i: (i, 0)),   # input_tensor tile
            pl.BlockSpec((1, H), lambda i: (0, 0)),    # gamma: resident
            pl.BlockSpec((1, H), lambda i: (0, 0)),    # beta:  resident
        ],
        out_specs=pl.BlockSpec((tr, H), lambda i: (i, 0)),
        compiler_params=pltpu.CompilerParams(
            dimension_semantics=("parallel",),          # rows independent
            vmem_limit_bytes=vmem_limit,
        ),
    )(h2, x2, g2, b2)
    return out2.reshape(S, B, H)


if __name__ == "__main__":
    # Small config: seq=8, batch=2, hidden=32
    S, B, H = 8, 2, 32
    key = jax.random.PRNGKey(0)
    k_h, k_x, k_g, k_b = jax.random.split(key, 4)

    hidden_states = jax.random.normal(k_h, (S, B, H), dtype=jnp.float32)
    input_tensor = jax.random.normal(k_x, (S, B, H), dtype=jnp.float32)
    # LayerNorm params (perturbed from the default 1/0 init so scale/shift
    # are exercised)
    gamma = 1.0 + 0.02 * jax.random.normal(k_g, (H,), dtype=jnp.float32)
    beta = 0.02 * jax.random.normal(k_b, (H,), dtype=jnp.float32)

    out = bert_self_output(hidden_states, input_tensor, gamma, beta)
    jax.block_until_ready(out)

    # Pure-JAX reference (dropout = identity in eval mode)
    s = input_tensor + hidden_states
    mu = jnp.mean(s, axis=-1, keepdims=True)
    var = jnp.mean((s - mu) ** 2, axis=-1, keepdims=True)
    ref = (s - mu) / jnp.sqrt(var + 1e-12) * gamma + beta
    assert jnp.allclose(out, ref, atol=1e-5, rtol=1e-5)

    print("KERNEL_OK")
</pallas_src>

<mosaic_0001>
module attributes {stable_mosaic.version = 11 : i64} {
  func.func @_self_output_kernel(%arg0: i32, %arg1: memref<16x32xf32, #tpu.memory_space<vmem>>, %arg2: memref<16x32xf32, #tpu.memory_space<vmem>>, %arg3: memref<1x32xf32, #tpu.memory_space<vmem>>, %arg4: memref<1x32xf32, #tpu.memory_space<vmem>>, %arg5: memref<16x32xf32, #tpu.memory_space<vmem>>) attributes {dimension_semantics = [#tpu.dimension_semantics<parallel>], iteration_bounds = array<i64: 1>, scalar_prefetch = 0 : i64, scratch_operands = 0 : i64, tpu.core_type = #tpu.core_type<tc>, window_params = [{transform_indices = @transform_0, window_bounds = array<i64: 16, 32>}, {transform_indices = @transform_1, window_bounds = array<i64: 16, 32>}, {pipeline_mode = #tpu.pipeline_mode<synchronous>, transform_indices = @transform_2, window_bounds = array<i64: 1, 32>}, {pipeline_mode = #tpu.pipeline_mode<synchronous>, transform_indices = @transform_3, window_bounds = array<i64: 1, 32>}, {transform_indices = @transform_4, window_bounds = array<i64: 16, 32>}]} {
    %c0 = arith.constant 0 : index
    %c0_0 = arith.constant 0 : index
    %0 = vector.load %arg1[%c0, %c0_0] : memref<16x32xf32, #tpu.memory_space<vmem>>, vector<16x32xf32>
    %c0_1 = arith.constant 0 : index
    %c0_2 = arith.constant 0 : index
    %1 = vector.load %arg2[%c0_1, %c0_2] : memref<16x32xf32, #tpu.memory_space<vmem>>, vector<16x32xf32>
    %2 = arith.addf %0, %1 : vector<16x32xf32>
    %cst = arith.constant dense<0.000000e+00> : vector<16xf32>
    %3 = vector.multi_reduction <add>, %2, %cst [1] : vector<16x32xf32> to vector<16xf32>
    %4 = vector.shape_cast %3 : vector<16xf32> to vector<16x1xf32>
    %5 = arith.mulf %2, %2 : vector<16x32xf32>
    %cst_3 = arith.constant dense<0.000000e+00> : vector<16xf32>
    %6 = vector.multi_reduction <add>, %5, %cst_3 [1] : vector<16x32xf32> to vector<16xf32>
    %7 = vector.shape_cast %6 : vector<16xf32> to vector<16x1xf32>
    %cst_4 = arith.constant 3.125000e-02 : f32
    %8 = vector.broadcast %cst_4 : f32 to vector<16x1xf32>
    %9 = arith.mulf %4, %8 : vector<16x1xf32>
    %cst_5 = arith.constant 3.125000e-02 : f32
    %10 = vector.broadcast %cst_5 : f32 to vector<16x1xf32>
    %11 = arith.mulf %7, %10 : vector<16x1xf32>
    %12 = arith.mulf %9, %9 : vector<16x1xf32>
    %13 = arith.subf %11, %12 : vector<16x1xf32>
    %cst_6 = arith.constant 0.000000e+00 : f32
    %14 = vector.broadcast %cst_6 : f32 to vector<16x1xf32>
    %15 = arith.maximumf %13, %14 : vector<16x1xf32>
    %cst_7 = arith.constant 9.99999996E-13 : f32
    %16 = vector.broadcast %cst_7 : f32 to vector<16x1xf32>
    %17 = arith.addf %15, %16 : vector<16x1xf32>
    %18 = math.rsqrt %17 : vector<16x1xf32>
    %19 = vector.broadcast %9 : vector<16x1xf32> to vector<16x32xf32>
    %20 = arith.subf %2, %19 : vector<16x32xf32>
    %21 = vector.broadcast %18 : vector<16x1xf32> to vector<16x32xf32>
    %22 = arith.mulf %20, %21 : vector<16x32xf32>
    %c0_8 = arith.constant 0 : index
    %c0_9 = arith.constant 0 : index
    %23 = vector.load %arg3[%c0_8, %c0_9] : memref<1x32xf32, #tpu.memory_space<vmem>>, vector<1x32xf32>
    %24 = vector.broadcast %23 : vector<1x32xf32> to vector<16x32xf32>
    %25 = arith.mulf %22, %24 : vector<16x32xf32>
    %c0_10 = arith.constant 0 : index
    %c0_11 = arith.constant 0 : index
    %26 = vector.load %arg4[%c0_10, %c0_11] : memref<1x32xf32, #tpu.memory_space<vmem>>, vector<1x32xf32>
    %27 = vector.broadcast %26 : vector<1x32xf32> to vector<16x32xf32>
    %28 = arith.addf %25, %27 : vector<16x32xf32>
    %c0_12 = arith.constant 0 : index
    %c0_13 = arith.constant 0 : index
    %29 = vector.load %arg5[%c0_12, %c0_13] : memref<16x32xf32, #tpu.memory_space<vmem>>, vector<16x32xf32>
    tpu.vector_store %arg5[%c0_12, %c0_13], %28 {strides = array<i32>} : memref<16x32xf32, #tpu.memory_space<vmem>>, vector<16x32xf32>,
    return
  }
  func.func @transform_0(%arg0: i32) -> (i32, i32) {
    %c0_i32 = arith.constant 0 : i32
    %c0_i32_0 = arith.constant 0 : i32
    return %arg0, %c0_i32 : i32, i32
  }
  func.func @transform_1(%arg0: i32) -> (i32, i32) {
    %c0_i32 = arith.constant 0 : i32
    %c0_i32_0 = arith.constant 0 : i32
    return %arg0, %c0_i32 : i32, i32
  }
  func.func @transform_2(%arg0: i32) -> (i32, i32) {
    %c0_i32 = arith.constant 0 : i32
    %c0_i32_0 = arith.constant 0 : i32
    %c0_i32_1 = arith.constant 0 : i32
    return %c0_i32, %c0_i32_0 : i32, i32
  }
  func.func @transform_3(%arg0: i32) -> (i32, i32) {
    %c0_i32 = arith.constant 0 : i32
    %c0_i32_0 = arith.constant 0 : i32
    %c0_i32_1 = arith.constant 0 : i32
    return %c0_i32, %c0_i32_0 : i32, i32
  }
  func.func @transform_4(%arg0: i32) -> (i32, i32) {
    %c0_i32 = arith.constant 0 : i32
    %c0_i32_0 = arith.constant 0 : i32
    return %arg0, %c0_i32 : i32, i32
  }
}

</mosaic_0001>

<llo_original>
// kernel: tpu_custom_call.1
$region0: #{tpu_custom_call.1}
  #allocation0 [shape = 'u32[]', space=smem, size = 0x4, offset = 0x4, fixed_abs, tag = 'smem constant byte address 0x4 - core index']
  #allocation1 [shape = 'u32[144,128]{1,0:T(1,128)}', space=vmem, size = 0x12000, scoped, tag = 'internal scratch']
  %s0 = inlined_call_operand.hbm [shape: f32[16,32], index: 0, kind: input, shape index: {}]
  %s1 = inlined_call_operand.hbm [shape: f32[16,32], index: 1, kind: input, shape index: {}]
  %s2 = inlined_call_operand.vmem [shape: f32[1,32], index: 2, kind: input, shape index: {}]
  %s3 = inlined_call_operand.vmem [shape: f32[1,32], index: 3, kind: input, shape index: {}]
  %s4 = inlined_call_operand.hbm [shape: f32[16,32], index: 4, kind: output, shape index: {}]
  %s5 = sld [smem:[#allocation0]]
  $region34: #{tpu_custom_call.1} parent=0
    _
  %s7 = ssub.s32 1, %s5
  %s8 = scalar_select 0, %s7, %s5
  $region1: #{tpu_custom_call.1} parent=0
    #allocation2 [shape = 'u8[8192]{0}', space=vmem, size = 0x2000, scoped, tag = 'input window, operand 0, single buffered']
    #allocation3 [shape = 's32[1]{0}', space=sflag, size = 0x4, scoped, tag = 'scoped memory for tpu_custom_call.1']
    #allocation4 [shape = 's32[1]{0}', space=sflag, size = 0x4, scoped, tag = 'scoped memory for tpu_custom_call.1']
    #allocation5 [shape = 'u8[8192]{0}', space=vmem, size = 0x2000, scoped, tag = 'input window, operand 1, single buffered']
    #allocation6 [shape = 's32[1]{0}', space=sflag, size = 0x4, scoped, tag = 'scoped memory for tpu_custom_call.1']
    #allocation7 [shape = 'u8[8192]{0}', space=vmem, size = 0x2000, scoped, tag = 'output window, operand 0, single buffered']
    %9 = vsyncpa [#allocation3], 0
    %10 = vsyncpa [#allocation6], 0
    %11 = vsyncpa [#allocation4], 0
    // Predicated region
    $region2: #{tpu_custom_call.1} parent=1 // pred_check
      _
    $region3: #{tpu_custom_call.1} parent=1 // pred_check_branch
      %13 = sbr.rel (0) target = $region5
    $region4: #{tpu_custom_call.1} parent=1 // pred_region
      %s15 = ssub.s32 256, 256
      %16 = vsyncadd [#allocation3], %s15
      %s17 = sshll.u32 [#allocation2], 4
      %s18 = int_to_ptr.vmem [resolvable:$true] %s17
      %23 = dma.hbm_to_vmem [thread:$0]  %s0, 256, %s18, [#allocation3], 128, 128, 8
    $region5: #{tpu_custom_call.1} parent=1 // pred_fallthru
      _
    // Predicated region
    $region6: #{tpu_custom_call.1} parent=1 // pred_check
      _
    $region7: #{tpu_custom_call.1} parent=1 // pred_check_branch
      %25 = sbr.rel (0) target = $region9
    $region8: #{tpu_custom_call.1} parent=1 // pred_region
      %s27 = ssub.s32 256, 256
      %28 = vsyncadd [#allocation6], %s27
      %s29 = sshll.u32 [#allocation5], 4
      %s30 = int_to_ptr.vmem [resolvable:$true] %s29
      %35 = dma.hbm_to_vmem [thread:$0]  %s1, 256, %s30, [#allocation6], 128, 128, 8
    $region9: #{tpu_custom_call.1} parent=1 // pred_fallthru
      _
    // Predicated region
    $region10: #{tpu_custom_call.1} parent=1 // pred_check
      _
    $region11: #{tpu_custom_call.1} parent=1 // pred_check_branch
      %37 = sbr.rel (0) target = $region13
    $region12: #{tpu_custom_call.1} parent=1 // pred_region
      _
    $region13: #{tpu_custom_call.1} parent=1 // pred_fallthru
      _
    // Predicated region
    $region14: #{tpu_custom_call.1} parent=1 // pred_check
      _
    $region15: #{tpu_custom_call.1} parent=1 // pred_check_branch
      %39 = sbr.rel (0) target = $region17
    $region16: #{tpu_custom_call.1} parent=1 // pred_region
      _
    $region17: #{tpu_custom_call.1} parent=1 // pred_fallthru
      _
    // Predicated region
    $region18: #{tpu_custom_call.1} parent=1 // pred_check
      _
    $region19: #{tpu_custom_call.1} parent=1 // pred_check_branch
      %41 = sbr.rel (0) target = $region21
    $region20: #{tpu_custom_call.1} parent=1 // pred_region
      %42 = dma.done [#allocation3], 256
    $region21: #{tpu_custom_call.1} parent=1 // pred_fallthru
      _
    // Predicated region
    $region22: #{tpu_custom_call.1} parent=1 // pred_check
      _
    $region23: #{tpu_custom_call.1} parent=1 // pred_check_branch
      %44 = sbr.rel (0) target = $region25
    $region24: #{tpu_custom_call.1} parent=1 // pred_region
      %45 = dma.done [#allocation6], 256
    $region25: #{tpu_custom_call.1} parent=1 // pred_fallthru
      _
    %v46 = vld [vmem:[#allocation2] sm:$0xff]
    %v47 = vld [vmem:[#allocation2 + $0x8] sm:$0xff]
    %v48 = vld [vmem:[#allocation5] sm:$0xff]
    %v49 = vld [vmem:[#allocation5 + $0x8] sm:$0xff]
    %v50 = vadd.f32 %v46, %v48
    %v51 = vadd.f32 %v47, %v49
    %vm52 = vcmask 261120
    %v53 = vsel %vm52, %v50, 0.0
    %54 = vadd.xlane.f32.xlu0 %v53
    %v55 = vpop.xlane.xlu0 %54
    %v56 = vsel %vm52, %v51, 0.0
    %57 = vadd.xlane.f32.xlu0 %v56
    %v58 = vpop.xlane.xlu0 %57
    %v59 = vmul.f32 %v50, %v50
    %v60 = vmul.f32 %v51, %v51
    %v61 = vsel %vm52, %v59, 0.0
    %62 = vadd.xlane.f32.xlu0 %v61
    %v63 = vpop.xlane.xlu0 %62
    %v64 = vsel %vm52, %v60, 0.0
    %65 = vadd.xlane.f32.xlu0 %v64
    %v66 = vpop.xlane.xlu0 %65
    %v67 = vmul.f32 %v55, 0.03125
    %v68 = vmul.f32 %v58, 0.03125
    %v69 = vmul.f32 %v63, 0.03125
    %v70 = vmul.f32 %v66, 0.03125
    %v71 = vmul.f32 %v67, %v67
    %v72 = vmul.f32 %v68, %v68
    %v73 = vsub.f32 %v69, %v71
    %v74 = vsub.f32 %v70, %v72
    %v75 = vmax.f32 %v73, 0.0
    %v76 = vmax.f32 %v74, 0.0
    %v77 = vadd.f32 %v75, 1e-12
    %v78 = vadd.f32 %v76, 1e-12
    %v79 = vrsqrt.pop %v77
    %v80 = vrsqrt.pop %v78
    %v81 = vsub.f32 %v50, %v67
    %v82 = vsub.f32 %v51, %v68
    %v83 = vmul.f32 %v81, %v79
    %v84 = vmul.f32 %v82, %v80
    %v85 = vld [vmem:[%s2] sm:$0x1]
    %v87 = vlaneseq
    %v88 = vshrl.u32 %v87, 7
    %v89 = vsub.s32 0, %v88
    %v90 = vrot.slane %v85, %v89
    %v92 = vmul.f32 %v83, %v90
    %v93 = vmul.f32 %v84, %v90
    %v94 = vld [vmem:[%s3] sm:$0x1]
    %v96 = vlaneseq
    %v97 = vshrl.u32 %v96, 7
    %v98 = vsub.s32 0, %v97
    %v99 = vrot.slane %v94, %v98
    %v101 = vadd.f32 %v92, %v99
    %v102 = vadd.f32 %v93, %v99
    %103 = vst.msk [vmem:[#allocation7] sm:$0xff] %vm52, %v101
    %104 = vst.msk [vmem:[#allocation7 + $0x8] sm:$0xff] %vm52, %v102
    // Predicated region
    $region26: #{tpu_custom_call.1} parent=1 // pred_check
      _
    $region27: #{tpu_custom_call.1} parent=1 // pred_check_branch
      %106 = sbr.rel (0) target = $region29
    $region28: #{tpu_custom_call.1} parent=1 // pred_region
      %s108 = ssub.s32 256, 256
      %109 = vsyncadd [#allocation4], %s108
      %s110 = sshll.u32 [#allocation7], 4
      %s111 = int_to_ptr.vmem [resolvable:$true] %s110
      %116 = dma.vmem_to_hbm [thread:$0]  %s111, 256, %s4, [#allocation4], 128, 128, 8
    $region29: #{tpu_custom_call.1} parent=1 // pred_fallthru
      _
    // Predicated region
    $region30: #{tpu_custom_call.1} parent=1 // pred_check
      _
    $region31: #{tpu_custom_call.1} parent=1 // pred_check_branch
      %118 = sbr.rel (0) target = $region33
    $region32: #{tpu_custom_call.1} parent=1 // pred_region
      %119 = dma.done [#allocation4], 256
    $region33: #{tpu_custom_call.1} parent=1 // pred_fallthru
      _
    %120 = vsyncpa [#allocation3], 1
    %121 = vsyncpa [#allocation6], 1
    %122 = vsyncpa [#allocation4], 1

</llo_original>
